<compile_context>
chip_gen: v7x
topology: tpu7x:2x2x1
jax: 0.10.0
libtpu: 0.0.40
codegen_flags: <defaults>
</compile_context>

<pallas_src>
import jax
import jax.numpy as jnp
from jax.experimental import pallas as pl
from jax.experimental.pallas import tpu as pltpu


# ----------------------------------------------------------------------------
# small helpers
# ----------------------------------------------------------------------------

def _round_up(x, m):
    return (x + m - 1) // m * m


def _pick_tile_g(S, c_max_pad, G, tile_budget_bytes=4 * 1024 * 1024, min_tiles=4):
    """Group-axis tile (multiple of 8 sublanes).  Budget ~tile_budget_bytes for the widest
    (S, tile_g, c_max_pad) bf16 slab; with double-buffered in+out slabs this stays well
    under the 48 MiB VMEM limit used below (and v7x's 64 MiB/TC physical).  Also cap tile_g
    so the "parallel" grid axis keeps >= min_tiles tiles for megacore load balance."""
    g8 = _round_up(G, 8)
    bytes_per_group = max(S * c_max_pad * 2, 1)          # bf16 activations
    tg = max(8, (tile_budget_bytes // bytes_per_group) // 8 * 8)
    if g8 >= 8 * min_tiles:
        tg = min(tg, _round_up((G + min_tiles - 1) // min_tiles, 8))
    return int(max(8, min(tg, g8, 2048)))


# ----------------------------------------------------------------------------
# Plain-JAX glue: sample_and_group (furthest point sample, ball query, gather).
# Data-dependent gathers with no clean rectangular-tile Pallas form.
# ----------------------------------------------------------------------------

def furthest_point_sample(xyz, npoint):
    """xyz: (B, N, 3) -> (B, npoint) int32 indices (same algorithm as pointnet2 CUDA)."""
    B, N, _ = xyz.shape

    def body(i, state):
        idxs, dists, last = state
        last_pt = jnp.take_along_axis(xyz, last[:, None, None], axis=1)   # (B,1,3)
        d = jnp.sum((xyz - last_pt) ** 2, axis=-1)                        # (B,N)
        dists = jnp.minimum(dists, d)
        nxt = jnp.argmax(dists, axis=-1).astype(jnp.int32)
        idxs = idxs.at[:, i].set(nxt)
        return idxs, dists, nxt

    idxs = jnp.zeros((B, npoint), jnp.int32)          # first sample is index 0
    dists = jnp.full((B, N), 1e10, jnp.float32)
    last = jnp.zeros((B,), jnp.int32)
    idxs, _, _ = jax.lax.fori_loop(1, npoint, body, (idxs, dists, last))
    return idxs


def gather_operation(points, idx):
    """points: (B, C, N), idx: (B, npoint) -> (B, C, npoint)"""
    B, C, _ = points.shape
    P = idx.shape[1]
    return jnp.take_along_axis(
        points, jnp.broadcast_to(idx[:, None, :], (B, C, P)), axis=2)


def ball_query(radius, nsample, xyz, new_xyz):
    """xyz: (B, N, 3), new_xyz: (B, npoint, 3) -> (B, npoint, nsample) int32.
    First `nsample` indices with dist^2 < radius^2 (ascending index order);
    remaining slots filled with the first valid index (0 if none)."""
    B, N, _ = xyz.shape
    d2 = jnp.sum((new_xyz[:, :, None, :] - xyz[:, None, :, :]) ** 2, axis=-1)
    mask = d2 < radius * radius
    arange = jnp.arange(N, dtype=jnp.int32)
    big = jnp.int32(N)
    keyed = jnp.where(mask, arange[None, None, :], big)
    neg_vals, _ = jax.lax.top_k(-keyed, nsample)      # nsample smallest keys, ascending
    sorted_idx = -neg_vals
    first = sorted_idx[:, :, 0:1]
    first = jnp.where(first == big, 0, first)
    idx = jnp.where(sorted_idx == big, first, sorted_idx)
    return idx.astype(jnp.int32)


def grouping_operation(points, idx):
    """points: (B, C, N), idx: (B, npoint, nsample) -> (B, C, npoint, nsample)"""
    B, C, _ = points.shape
    _, P, S = idx.shape
    flat = jnp.broadcast_to(idx.reshape(B, 1, P * S), (B, C, P * S))
    return jnp.take_along_axis(points, flat, axis=2).reshape(B, C, P, S)


def sample_and_group(xyz, points, npoint, nsample, radius, use_xyz=True):
    xyz_flipped = jnp.transpose(xyz, (0, 2, 1))                  # (B, N, 3)
    fps_idx = furthest_point_sample(xyz_flipped, npoint)
    new_xyz = gather_operation(xyz, fps_idx)                     # (B, 3, npoint)
    idx = ball_query(radius, nsample, xyz_flipped,
                     jnp.transpose(new_xyz, (0, 2, 1)))
    grouped_xyz = grouping_operation(xyz, idx)                   # (B,3,npoint,nsample)
    grouped_xyz = grouped_xyz - new_xyz[:, :, :, None]
    if points is not None:
        grouped_points = grouping_operation(points, idx)
        if use_xyz:
            new_points = jnp.concatenate([grouped_xyz, grouped_points], axis=1)
        else:
            new_points = grouped_points
    else:
        new_points = grouped_xyz
    return new_xyz, new_points, idx, grouped_xyz


def sample_and_group_all(xyz, points, use_xyz=True):
    b, _, nsample = xyz.shape
    new_xyz = jnp.zeros((b, 3, 1), jnp.float32)
    grouped_xyz = xyz.reshape(b, 3, 1, nsample)
    idx = jnp.broadcast_to(jnp.arange(nsample, dtype=jnp.int32).reshape(1, 1, nsample),
                           (b, 1, nsample))
    if points is not None:
        if use_xyz:
            new_points = jnp.concatenate([xyz, points], axis=1)
        else:
            new_points = points
        new_points = new_points[:, :, None, :]
    else:
        new_points = grouped_xyz
    return new_xyz, new_points, idx, grouped_xyz


# ----------------------------------------------------------------------------
# Pallas kernels
# ----------------------------------------------------------------------------

def _make_conv_stats_kernel(S, tile_g, cin, cout, apply_prologue, apply_mask,
                            g_valid, emit_stats):
    """Fused intermediate-layer step on one (S, tile_g, cin) tile:
         h = relu(x * scale + shift)   (folded BN of the PREVIOUS layer, f32)
         z = h @ W                     (bf16 MXU matmul, f32 accumulation)
       z is written back in bf16; optional per-tile partial sum / sum-of-squares of the
       f32 accumulator feed the global BatchNorm statistics."""
    rows = S * tile_g

    def kernel(x_ref, w_ref, scale_ref, shift_ref, z_ref, *stats_out):
        h = x_ref[...]                                              # (S, tile_g, cin)
        if apply_prologue:
            h = jnp.maximum(h.astype(jnp.float32) * scale_ref[...] + shift_ref[...], 0.0)
        if apply_mask:
            # zero rows of padded groups so they contribute nothing to the BN stats
            # (only the last grid tile can contain padded groups; mem-bound, so cheap)
            g = pl.program_id(0) * tile_g + jax.lax.broadcasted_iota(
                jnp.int32, (1, tile_g, 1), 1)
            h = jnp.where(g < g_valid, h, 0.0)
        z = jnp.dot(h.reshape(rows, cin).astype(jnp.bfloat16), w_ref[...],
                    preferred_element_type=jnp.float32)             # (rows, cout) f32
        z_ref[...] = z.astype(jnp.bfloat16).reshape(S, tile_g, cout)
        if emit_stats:
            s1 = jnp.sum(z, axis=0, keepdims=True)                  # (1, cout)
            s2 = jnp.sum(z * z, axis=0, keepdims=True)              # (1, cout)
            stats_out[0][...] = jnp.concatenate(
                [s1, s2, jnp.zeros((6, cout), jnp.float32)], axis=0).reshape(1, 8, cout)

    return kernel


def _make_last_conv_max_kernel(S, tile_g, cin, cout, apply_prologue, apply_mask,
                               g_valid, emit_stats):
    """Last layer: same prologue + matmul, but instead of writing the full (S,tile_g,cout)
    activation it emits the per-group max-over-S and min-over-S of the f32 accumulator
    (tiny lane-dense (tile_g, cout) blocks).  The folded BN + ReLU + torch.max(dim=3) is
    finished exactly in plain JAX on the (G, cout) result (max vs min chosen by sign of
    the per-channel BN scale)."""
    rows = S * tile_g

    def kernel(x_ref, w_ref, scale_ref, shift_ref, zmax_ref, zmin_ref, *stats_out):
        h = x_ref[...]
        if apply_prologue:
            h = jnp.maximum(h.astype(jnp.float32) * scale_ref[...] + shift_ref[...], 0.0)
        if apply_mask:
            g = pl.program_id(0) * tile_g + jax.lax.broadcasted_iota(
                jnp.int32, (1, tile_g, 1), 1)
            h = jnp.where(g < g_valid, h, 0.0)
        z = jnp.dot(h.reshape(rows, cin).astype(jnp.bfloat16), w_ref[...],
                    preferred_element_type=jnp.float32)             # (rows, cout) f32
        z3 = z.reshape(S, tile_g, cout)
        zmax_ref[...] = jnp.max(z3, axis=0)                         # (tile_g, cout)
        zmin_ref[...] = jnp.min(z3, axis=0)
        if emit_stats:
            s1 = jnp.sum(z, axis=0, keepdims=True)
            s2 = jnp.sum(z * z, axis=0, keepdims=True)
            stats_out[0][...] = jnp.concatenate(
                [s1, s2, jnp.zeros((6, cout), jnp.float32)], axis=0).reshape(1, 8, cout)

    return kernel


def pointnet_mlp_max(x, layers, if_bn=True, eps=1e-5):
    """x: (S, G, c0) channels-last, nsample-major (c0 == layers[0] weight K, padded only
    to a multiple of 8).  layers: list of (w bf16 (cin_p, cout_pad), bias_pad, gamma_pad,
    beta_pad, cout, cout_pad).  Returns relu(BN(conv(...))) max-pooled over S: (G, cout_last)."""
    S, G, c0 = x.shape
    assert c0 == layers[0][0].shape[0]
    x = x.astype(jnp.bfloat16)

    c_max_pad = max(l[0].shape[1] for l in layers)
    tile_g = _pick_tile_g(S, c_max_pad, G)
    g_pad = _round_up(G, tile_g)
    n_tiles = g_pad // tile_g
    n_valid = float(S * G)                 # BN stats over ALL B*npoint*nsample rows
    padded_groups = g_pad != G

    if padded_groups:
        x = jnp.pad(x, ((0, 0), (0, g_pad - G), (0, 0)))

    cparams = pltpu.CompilerParams(
        dimension_semantics=("parallel",),             # megacore sharding on v7x
        vmem_limit_bytes=48 * 1024 * 1024)             # v5e default scoped VMEM is 16 MiB

    z = x
    n_layers = len(layers)
    scale = jnp.ones((c0,), jnp.float32)               # layer 0 has no prologue
    shift = jnp.zeros((c0,), jnp.float32)
    zmax = zmin = None

    for li, (w, bias, gamma, beta, cout, cout_pad) in enumerate(layers):
        cin_p = w.shape[0]
        is_last = li == n_layers - 1
        apply_prologue = li > 0
        emit_stats = if_bn
        apply_mask = padded_groups and apply_prologue and emit_stats

        if not is_last:
            kernel = _make_conv_stats_kernel(S, tile_g, cin_p, cout_pad,
                                             apply_prologue, apply_mask, G, emit_stats)
            out_shape = [jax.ShapeDtypeStruct((S, g_pad, cout_pad), jnp.bfloat16)]
            out_specs = [pl.BlockSpec((S, tile_g, cout_pad), lambda t: (0, t, 0))]
        else:
            kernel = _make_last_conv_max_kernel(S, tile_g, cin_p, cout_pad,
                                                apply_prologue, apply_mask, G, emit_stats)
            out_shape = [jax.ShapeDtypeStruct((g_pad, cout_pad), jnp.float32),
                         jax.ShapeDtypeStruct((g_pad, cout_pad), jnp.float32)]
            out_specs = [pl.BlockSpec((tile_g, cout_pad), lambda t: (t, 0)),
                         pl.BlockSpec((tile_g, cout_pad), lambda t: (t, 0))]
        if emit_stats:
            out_shape.append(jax.ShapeDtypeStruct((n_tiles, 8, cout_pad), jnp.float32))
            out_specs.append(pl.BlockSpec((1, 8, cout_pad), lambda t: (t, 0, 0)))

        outs = pl.pallas_call(
            kernel,
            out_shape=tuple(out_shape),
            grid=(n_tiles,),
            in_specs=[
                pl.BlockSpec((S, tile_g, cin_p), lambda t: (0, t, 0)),
                pl.BlockSpec((cin_p, cout_pad), lambda t: (0, 0)),   # weights resident
                pl.BlockSpec((1, cin_p), lambda t: (0, 0)),
                pl.BlockSpec((1, cin_p), lambda t: (0, 0)),
            ],
            out_specs=tuple(out_specs),
            compiler_params=cparams,
        )(z, w, scale.reshape(1, cin_p), shift.reshape(1, cin_p))

        if emit_stats:
            # cross-tile reduction of partial stats is tiny: (n_tiles, 2, cout_pad)
            # TODO(synk): single-pass E[z^2]-E[z]^2 can cancel when |mean| >> std; switch
            #             to a shifted accumulation if tight BatchNorm parity is required.
            tot = jnp.sum(outs[-1][:, :2, :], axis=0)                # (2, cout_pad)
            mean = tot[0] / n_valid
            var = jnp.maximum(tot[1] / n_valid - mean * mean, 0.0)   # biased var (train)
            inv_std = jax.lax.rsqrt(var + eps)
            scale = gamma * inv_std            # BN folded into one scale/shift;
            shift = beta - mean * scale        # conv bias is cancelled by the BN mean
        else:
            scale = jnp.ones((cout_pad,), jnp.float32)
            shift = bias

        if not is_last:
            z = outs[0]
        else:
            zmax, zmin = outs[0], outs[1]

    cout_last, cout_last_pad = layers[-1][4], layers[-1][5]
    # Exact fused epilogue: max_S relu(a*z + b) = relu(a*max_S z + b) if a>=0
    #                                             relu(a*min_S z + b) otherwise.
    lin = jnp.where(scale[None, :] >= 0.0,
                    scale[None, :] * zmax + shift[None, :],
                    scale[None, :] * zmin + shift[None, :])
    out = jnp.maximum(lin, 0.0)
    return out[:G, :cout_last]


# ----------------------------------------------------------------------------
# Module wrapper (deterministic parameter init, PyTorch __init__ shapes)
# ----------------------------------------------------------------------------

class PointNetSAModule:
    def __init__(self, npoint, nsample, radius, in_channel, mlp_dims,
                 if_bn=True, group_all=False, use_xyz=True, key=None):
        self.npoint = npoint
        self.nsample = nsample
        self.radius = radius
        self.if_bn = if_bn
        self.group_all = group_all
        self.use_xyz = use_xyz
        if use_xyz:
            in_channel += 3
        self.in_channel = in_channel
        self.out_channel = mlp_dims[-1]

        key = key if key is not None else jax.random.PRNGKey(0)
        layers = []
        last = in_channel
        last_pad = _round_up(in_channel, 8)   # layer-0 K padded to sublanes only (no 128 pad)
        for out_c in mlp_dims:
            out_pad = _round_up(out_c, 128)
            key, kw, kb = jax.random.split(key, 3)
            bound = 1.0 / (last ** 0.5)       # PyTorch Conv2d default init, 1x1 kernel
            w = jax.random.uniform(kw, (last, out_c), jnp.float32, -bound, bound)
            b = jax.random.uniform(kb, (out_c,), jnp.float32, -bound, bound)
            # Output channels padded to 128-lane multiples; weights stored bf16
            # (MXU-native, matmuls accumulate in f32).  Padded rows/cols are zero.
            w_pad = jnp.zeros((last_pad, out_pad), jnp.float32).at[:last, :out_c].set(w)
            w_pad = w_pad.astype(jnp.bfloat16)
            b_pad = jnp.zeros((out_pad,), jnp.float32).at[:out_c].set(b)
            gamma_pad = jnp.zeros((out_pad,), jnp.float32).at[:out_c].set(1.0)
            beta_pad = jnp.zeros((out_pad,), jnp.float32)
            layers.append((w_pad, b_pad, gamma_pad, beta_pad, out_c, out_pad))
            last, last_pad = out_c, out_pad
        self.layers = layers

    def __call__(self, xyz, points):
        if self.group_all:
            new_xyz, new_points, idx, grouped_xyz = sample_and_group_all(
                xyz, points, self.use_xyz)
        else:
            new_xyz, new_points, idx, grouped_xyz = sample_and_group(
                xyz, points, self.npoint, self.nsample, self.radius, self.use_xyz)
        B, C_in, P, S = new_points.shape
        # Channels-last, nsample-major layout: the final torch.max(dim=3) becomes a
        # lane-aligned running maximum over whole leading slabs inside the last kernel.
        # Channels are only padded to a multiple of 8 (explicit zeros) — no 128-lane HBM pad.
        # TODO(synk): fuse this gather/transpose into the layer-0 kernel via scalar prefetch
        #             of `idx` (Element index_map / manual DMA) to remove the remaining
        #             HBM round trips before the first Pallas layer.
        c0p = self.layers[0][0].shape[0]
        x = jnp.transpose(new_points, (3, 0, 2, 1)).reshape(S, B * P, C_in)
        if c0p != C_in:
            x = jnp.pad(x, ((0, 0), (0, 0), (0, c0p - C_in)))
        x = x.astype(jnp.bfloat16)
        feats = pointnet_mlp_max(x, self.layers, if_bn=self.if_bn)     # (B*P, C_out)
        new_points_out = jnp.transpose(
            feats.reshape(B, P, self.out_channel), (0, 2, 1))          # (B, C_out, P)
        return new_xyz, new_points_out


# ----------------------------------------------------------------------------

if __name__ == "__main__":
    key = jax.random.PRNGKey(0)
    kx, kp, k1, k2, k3 = jax.random.split(key, 5)

    B, N, f = 2, 16, 4
    npoint, nsample, radius = 8, 8, 0.4
    mlp_dims = [16, 32]

    xyz = jax.random.uniform(kx, (B, 3, N), jnp.float32)          # (B, 3, N)
    points = jax.random.normal(kp, (B, f, N), jnp.float32)        # (B, f, N)

    # 1) standard path: BN on, grouped sampling
    module = PointNetSAModule(npoint=npoint, nsample=nsample, radius=radius,
                              in_channel=f, mlp_dims=mlp_dims, if_bn=True,
                              group_all=False, key=k1)
    new_xyz, new_points = module(xyz, points)
    jax.block_until_ready((new_xyz, new_points))
    assert new_xyz.shape == (B, 3, npoint), new_xyz.shape
    assert new_points.shape == (B, mlp_dims[-1], npoint), new_points.shape
    assert bool(jnp.all(jnp.isfinite(new_points)))

    # 2) group_all path (exercises padded-group masking inside the kernels)
    module_all = PointNetSAModule(npoint=npoint, nsample=nsample, radius=radius,
                                  in_channel=f, mlp_dims=mlp_dims, if_bn=True,
                                  group_all=True, key=k2)
    xyz_a, pts_a = module_all(xyz, points)
    jax.block_until_ready((xyz_a, pts_a))
    assert xyz_a.shape == (B, 3, 1), xyz_a.shape
    assert pts_a.shape == (B, mlp_dims[-1], 1), pts_a.shape
    assert bool(jnp.all(jnp.isfinite(pts_a)))

    # 3) BN disabled (exercises the stats-free kernel variant, bias-only epilogue)
    module_nb = PointNetSAModule(npoint=npoint, nsample=nsample, radius=radius,
                                 in_channel=f, mlp_dims=mlp_dims, if_bn=False,
                                 group_all=False, key=k3)
    xyz_n, pts_n = module_nb(xyz, points)
    jax.block_until_ready((xyz_n, pts_n))
    assert pts_n.shape == (B, mlp_dims[-1], npoint), pts_n.shape
    assert bool(jnp.all(jnp.isfinite(pts_n)))

    print("KERNEL_OK")
</pallas_src>

<mosaic_0001>
module attributes {stable_mosaic.version = 11 : i64} {
  func.func @kernel(%arg0: i32, %arg1: memref<8x16x8xbf16, #tpu.memory_space<vmem>>, %arg2: memref<8x128xbf16, #tpu.memory_space<vmem>>, %arg3: memref<1x8xf32, #tpu.memory_space<vmem>>, %arg4: memref<1x8xf32, #tpu.memory_space<vmem>>, %arg5: memref<8x16x128xbf16, #tpu.memory_space<vmem>>, %arg6: memref<1x8x128xf32, #tpu.memory_space<vmem>>) attributes {dimension_semantics = [#tpu.dimension_semantics<parallel>], iteration_bounds = array<i64: 1>, scalar_prefetch = 0 : i64, scratch_operands = 0 : i64, tpu.core_type = #tpu.core_type<tc>, window_params = [{transform_indices = @transform_0, window_bounds = array<i64: 8, 16, 8>}, {pipeline_mode = #tpu.pipeline_mode<synchronous>, transform_indices = @transform_1, window_bounds = array<i64: 8, 128>}, {pipeline_mode = #tpu.pipeline_mode<synchronous>, transform_indices = @transform_2, window_bounds = array<i64: 1, 8>}, {pipeline_mode = #tpu.pipeline_mode<synchronous>, transform_indices = @transform_3, window_bounds = array<i64: 1, 8>}, {transform_indices = @transform_4, window_bounds = array<i64: 8, 16, 128>}, {transform_indices = @transform_5, window_bounds = array<i64: 1, 8, 128>}]} {
    %c0 = arith.constant 0 : index
    %c0_0 = arith.constant 0 : index
    %c0_1 = arith.constant 0 : index
    %0 = vector.load %arg1[%c0, %c0_0, %c0_1] : memref<8x16x8xbf16, #tpu.memory_space<vmem>>, vector<8x16x8xbf16>
    %1 = vector.shape_cast %0 : vector<8x16x8xbf16> to vector<128x8xbf16>
    %c0_2 = arith.constant 0 : index
    %c0_3 = arith.constant 0 : index
    %2 = vector.load %arg2[%c0_2, %c0_3] : memref<8x128xbf16, #tpu.memory_space<vmem>>, vector<8x128xbf16>
    %cst = arith.constant dense<0.000000e+00> : vector<128x128xf32>
    %3 = tpu.matmul %1, %2, %cst {dimension_numbers = #tpu.dot_dimension_numbers<[1], [0], [0], [1], [0, 0, 1, 1], [], []>} : vector<128x8xbf16>, vector<8x128xbf16>, vector<128x128xf32> -> vector<128x128xf32>
    %4 = arith.truncf %3 : vector<128x128xf32> to vector<128x128xbf16>
    %5 = vector.shape_cast %4 : vector<128x128xbf16> to vector<8x16x128xbf16>
    %c0_4 = arith.constant 0 : index
    %c0_5 = arith.constant 0 : index
    %c0_6 = arith.constant 0 : index
    %6 = vector.load %arg5[%c0_4, %c0_5, %c0_6] : memref<8x16x128xbf16, #tpu.memory_space<vmem>>, vector<8x16x128xbf16>
    tpu.vector_store %arg5[%c0_4, %c0_5, %c0_6], %5 {strides = array<i32>} : memref<8x16x128xbf16, #tpu.memory_space<vmem>>, vector<8x16x128xbf16>,
    %cst_7 = arith.constant dense<0.000000e+00> : vector<128xf32>
    %7 = vector.multi_reduction <add>, %3, %cst_7 [0] : vector<128x128xf32> to vector<128xf32>
    %8 = vector.shape_cast %7 : vector<128xf32> to vector<1x128xf32>
    %9 = arith.mulf %3, %3 : vector<128x128xf32>
    %cst_8 = arith.constant dense<0.000000e+00> : vector<128xf32>
    %10 = vector.multi_reduction <add>, %9, %cst_8 [0] : vector<128x128xf32> to vector<128xf32>
    %11 = vector.shape_cast %10 : vector<128xf32> to vector<1x128xf32>
    %cst_9 = arith.constant 0.000000e+00 : f32
    %12 = vector.broadcast %cst_9 : f32 to vector<6x128xf32>
    %13 = tpu.concatenate %8, %11, %12 in 0 : vector<1x128xf32>, vector<1x128xf32>, vector<6x128xf32> -> vector<8x128xf32>
    %14 = vector.shape_cast %13 : vector<8x128xf32> to vector<1x8x128xf32>
    %c0_10 = arith.constant 0 : index
    %c0_11 = arith.constant 0 : index
    %c0_12 = arith.constant 0 : index
    %15 = vector.load %arg6[%c0_10, %c0_11, %c0_12] : memref<1x8x128xf32, #tpu.memory_space<vmem>>, vector<1x8x128xf32>
    tpu.vector_store %arg6[%c0_10, %c0_11, %c0_12], %14 {strides = array<i32>} : memref<1x8x128xf32, #tpu.memory_space<vmem>>, vector<1x8x128xf32>,
    return
  }
  func.func @transform_0(%arg0: i32) -> (i32, i32, i32) {
    %c0_i32 = arith.constant 0 : i32
    %c0_i32_0 = arith.constant 0 : i32
    %c0_i32_1 = arith.constant 0 : i32
    return %c0_i32, %arg0, %c0_i32_0 : i32, i32, i32
  }
  func.func @transform_1(%arg0: i32) -> (i32, i32) {
    %c0_i32 = arith.constant 0 : i32
    %c0_i32_0 = arith.constant 0 : i32
    %c0_i32_1 = arith.constant 0 : i32
    return %c0_i32, %c0_i32_0 : i32, i32
  }
  func.func @transform_2(%arg0: i32) -> (i32, i32) {
    %c0_i32 = arith.constant 0 : i32
    %c0_i32_0 = arith.constant 0 : i32
    %c0_i32_1 = arith.constant 0 : i32
    return %c0_i32, %c0_i32_0 : i32, i32
  }
  func.func @transform_3(%arg0: i32) -> (i32, i32) {
    %c0_i32 = arith.constant 0 : i32
    %c0_i32_0 = arith.constant 0 : i32
    %c0_i32_1 = arith.constant 0 : i32
    return %c0_i32, %c0_i32_0 : i32, i32
  }
  func.func @transform_4(%arg0: i32) -> (i32, i32, i32) {
    %c0_i32 = arith.constant 0 : i32
    %c0_i32_0 = arith.constant 0 : i32
    %c0_i32_1 = arith.constant 0 : i32
    return %c0_i32, %arg0, %c0_i32_0 : i32, i32, i32
  }
  func.func @transform_5(%arg0: i32) -> (i32, i32, i32) {
    %c0_i32 = arith.constant 0 : i32
    %c0_i32_0 = arith.constant 0 : i32
    %c0_i32_1 = arith.constant 0 : i32
    return %arg0, %c0_i32, %c0_i32_0 : i32, i32, i32
  }
}

</mosaic_0001>

<llo_original>
// kernel: tpu_custom_call.1
$region0: #{tpu_custom_call.1}
  #allocation0 [shape = 'u32[]', space=smem, size = 0x4, offset = 0x4, fixed_abs, tag = 'smem constant byte address 0x4 - core index']
  #allocation1 [shape = 'u32[144,128]{1,0:T(1,128)}', space=vmem, size = 0x12000, scoped, tag = 'internal scratch']
  %s0 = inlined_call_operand.vmem [shape: bf16[8,16,8], index: 0, kind: input, shape index: {}]
  %s1 = inlined_call_operand.vmem [shape: bf16[8,128], index: 1, kind: input, shape index: {}]
  %s2 = inlined_call_operand.vmem [shape: f32[1,8], index: 2, kind: input, shape index: {}]
  %s3 = inlined_call_operand.vmem [shape: f32[1,8], index: 3, kind: input, shape index: {}]
  %s4 = inlined_call_operand.hbm [shape: bf16[8,16,128], index: 4, kind: output, shape index: {0}]
  %s5 = inlined_call_operand.hbm [shape: f32[1,8,128], index: 5, kind: output, shape index: {1}]
  %6 = xla_tuple %s4, %s5
  %s7 = sld [smem:[#allocation0]]
  $region34: #{tpu_custom_call.1} parent=0
    _
  %s9 = ssub.s32 1, %s7
  %s10 = scalar_select 0, %s9, %s7
  $region1: #{tpu_custom_call.1} parent=0
    #allocation2 [shape = 'u8[32768]{0}', space=vmem, size = 0x8000, scoped, tag = 'output window, operand 0, single buffered']
    #allocation3 [shape = 's32[1]{0}', space=sflag, size = 0x4, scoped, tag = 'scoped memory for tpu_custom_call.1']
    #allocation4 [shape = 'u8[4096]{0}', space=vmem, size = 0x1000, scoped, tag = 'output window, operand 1, single buffered']
    #allocation5 [shape = 's32[1]{0}', space=sflag, size = 0x4, scoped, tag = 'scoped memory for tpu_custom_call.1']
    %11 = vsyncpa [#allocation3], 0
    %12 = vsyncpa [#allocation5], 0
    // Predicated region
    $region2: #{tpu_custom_call.1} parent=1 // pred_check
      _
    $region3: #{tpu_custom_call.1} parent=1 // pred_check_branch
      %14 = sbr.rel (0) target = $region5
    $region4: #{tpu_custom_call.1} parent=1 // pred_region
      _
    $region5: #{tpu_custom_call.1} parent=1 // pred_fallthru
      _
    // Predicated region
    $region6: #{tpu_custom_call.1} parent=1 // pred_check
      _
    $region7: #{tpu_custom_call.1} parent=1 // pred_check_branch
      %16 = sbr.rel (0) target = $region9
    $region8: #{tpu_custom_call.1} parent=1 // pred_region
      _
    $region9: #{tpu_custom_call.1} parent=1 // pred_fallthru
      _
    // Predicated region
    $region10: #{tpu_custom_call.1} parent=1 // pred_check
      _
    $region11: #{tpu_custom_call.1} parent=1 // pred_check_branch
      %18 = sbr.rel (0) target = $region13
    $region12: #{tpu_custom_call.1} parent=1 // pred_region
      _
    $region13: #{tpu_custom_call.1} parent=1 // pred_fallthru
      _
    // Predicated region
    $region14: #{tpu_custom_call.1} parent=1 // pred_check
      _
    $region15: #{tpu_custom_call.1} parent=1 // pred_check_branch
      %20 = sbr.rel (0) target = $region17
    $region16: #{tpu_custom_call.1} parent=1 // pred_region
      _
    $region17: #{tpu_custom_call.1} parent=1 // pred_fallthru
      _
    %v22 = vld [vmem:[%s0] sm:$0xf]
    %v23 = vld [vmem:[%s0 + $0x4] sm:$0xf]
    %v24 = vld [vmem:[%s0 + $0x8] sm:$0xf]
    %v25 = vld [vmem:[%s0 + $0xc] sm:$0xf]
    %v26 = vld [vmem:[%s0 + $0x10] sm:$0xf]
    %v27 = vld [vmem:[%s0 + $0x14] sm:$0xf]
    %v28 = vld [vmem:[%s0 + $0x18] sm:$0xf]
    %v29 = vld [vmem:[%s0 + $0x1c] sm:$0xf]
    %v30 = vld [vmem:[%s0 + $0x20] sm:$0xf]
    %v31 = vld [vmem:[%s0 + $0x24] sm:$0xf]
    %v32 = vld [vmem:[%s0 + $0x28] sm:$0xf]
    %v33 = vld [vmem:[%s0 + $0x2c] sm:$0xf]
    %v34 = vld [vmem:[%s0 + $0x30] sm:$0xf]
    %v35 = vld [vmem:[%s0 + $0x34] sm:$0xf]
    %v36 = vld [vmem:[%s0 + $0x38] sm:$0xf]
    %v37 = vld [vmem:[%s0 + $0x3c] sm:$0xf]
    %v38 = vld [vmem:[%s1] sm:$0xf]
    %v55 = vunpack.c.l.b16 %v22
    %v56 = vunpack.c.l.b16 %v23
    %v57 = vunpack.c.l.b16 %v24
    %v58 = vunpack.c.l.b16 %v25
    %v59 = vunpack.c.l.b16 %v26
    %v60 = vunpack.c.l.b16 %v27
    %v61 = vunpack.c.l.b16 %v28
    %v62 = vunpack.c.l.b16 %v29
    %v63 = vunpack.c.l.b16 %v30
    %v64 = vunpack.c.l.b16 %v31
    %v65 = vunpack.c.l.b16 %v32
    %v66 = vunpack.c.l.b16 %v33
    %v67 = vunpack.c.l.b16 %v34
    %v68 = vunpack.c.l.b16 %v35
    %v69 = vunpack.c.l.b16 %v36
    %v70 = vunpack.c.l.b16 %v37
    %v71 = vpack.c.b16 %v56, %v55
    %v72 = vpack.c.b16 %v58, %v57
    %v73 = vpack.c.b16 %v60, %v59
    %v74 = vpack.c.b16 %v62, %v61
    %v75 = vpack.c.b16 %v64, %v63
    %v76 = vpack.c.b16 %v66, %v65
    %v77 = vpack.c.b16 %v68, %v67
    %v78 = vpack.c.b16 %v70, %v69
    %vm79 = vcmask 64512
    %v81 = vsel %vm79, %v71, 0
    %v84 = vsel %vm79, %v72, 0
    %v87 = vsel %vm79, %v73, 0
    %v90 = vsel %vm79, %v74, 0
    %v93 = vsel %vm79, %v75, 0
    %v96 = vsel %vm79, %v76, 0
    %v99 = vsel %vm79, %v77, 0
    %v102 = vsel %vm79, %v78, 0
    %vm104 = vcmask 1043456
    %v106 = vsel %vm104, %v38, 0
    %108 = vmatprep.subr.bf16.mxu0 0
    %109 = vmatpush1.bf16.msra.mxu0 %v106
    %110 = vmatprep.subr.bf16.mxu0 0
    %111 = vmatpush1.bf16.msra.mxu0 0
    %112 = vmatprep.subr.bf16.mxu0 0
    %113 = vmatpush1.bf16.msra.mxu0 0
    %114 = vmatprep.subr.bf16.mxu0 0
    %115 = vmatpush1.bf16.msra.mxu0 0
    %116 = vmatprep.subr.bf16.mxu0 0
    %117 = vmatpush1.bf16.msra.mxu0 0
    %118 = vmatprep.subr.bf16.mxu0 0
    %119 = vmatpush1.bf16.msra.mxu0 0
    %120 = vmatprep.subr.bf16.mxu0 0
    %121 = vmatpush1.bf16.msra.mxu0 0
    %122 = vmatprep.subr.bf16.mxu0 0
    %123 = vmatpush1.bf16.msra.mxu0 0
    %124 = vmatprep.subr.bf16.mxu0 0
    %125 = vmatpush1.bf16.msra.mxu0 0
    %126 = vmatprep.subr.bf16.mxu0 0
    %127 = vmatpush1.bf16.msra.mxu0 0
    %128 = vmatprep.subr.bf16.mxu0 0
    %129 = vmatpush1.bf16.msra.mxu0 0
    %130 = vmatprep.subr.bf16.mxu0 0
    %131 = vmatpush1.bf16.msra.mxu0 0
    %132 = vmatprep.subr.bf16.mxu0 0
    %133 = vmatpush1.bf16.msra.mxu0 0
    %134 = vmatprep.subr.bf16.mxu0 0
    %135 = vmatpush1.bf16.msra.mxu0 0
    %136 = vmatprep.subr.bf16.mxu0 0
    %137 = vmatpush1.bf16.msra.mxu0 0
    %138 = vmatprep.subr.bf16.mxu0 0
    %139 = vmatpush1.bf16.msra.mxu0 0
    %140 = vmatprep.mubr.bf16.mxu0 0
    %141 = vmatmul.mubr.bf16.gmra.mrb[0].mxu0 %v81
    %v142 = vpop.f32.mrb[0].mxu0
    %v143 = vadd.f32 0.0, %v142
    %v144 = vpop.f32.mrb[0].mxu0
    %v145 = vpop.f32.mrb[0].mxu0
    %v146 = vadd.f32 0.0, %v145
    %v147 = vpop.f32.mrb[0].mxu0
    %148 = vmatprep.mubr.bf16.mxu0 0
    %149 = vmatmul.mubr.bf16.gmra.mrb[0].mxu0 %v84
    %v150 = vpop.f32.mrb[0].mxu0
    %v151 = vadd.f32 0.0, %v150
    %v152 = vpop.f32.mrb[0].mxu0
    %v153 = vpop.f32.mrb[0].mxu0
    %v154 = vadd.f32 0.0, %v153
    %v155 = vpop.f32.mrb[0].mxu0
    %156 = vmatprep.mubr.bf16.mxu0 0
    %157 = vmatmul.mubr.bf16.gmra.mrb[0].mxu0 %v87
    %v158 = vpop.f32.mrb[0].mxu0
    %v159 = vadd.f32 0.0, %v158
    %v160 = vpop.f32.mrb[0].mxu0
    %v161 = vpop.f32.mrb[0].mxu0
    %v162 = vadd.f32 0.0, %v161
    %v163 = vpop.f32.mrb[0].mxu0
    %164 = vmatprep.mubr.bf16.mxu0 0
    %165 = vmatmul.mubr.bf16.gmra.mrb[0].mxu0 %v90
    %v166 = vpop.f32.mrb[0].mxu0
    %v167 = vadd.f32 0.0, %v166
    %v168 = vpop.f32.mrb[0].mxu0
    %v169 = vpop.f32.mrb[0].mxu0
    %v170 = vadd.f32 0.0, %v169
    %v171 = vpop.f32.mrb[0].mxu0
    %172 = vmatprep.mubr.bf16.mxu0 0
    %173 = vmatmul.mubr.bf16.gmra.mrb[0].mxu0 %v93
    %v174 = vpop.f32.mrb[0].mxu0
    %v175 = vadd.f32 0.0, %v174
    %v176 = vpop.f32.mrb[0].mxu0
    %v177 = vpop.f32.mrb[0].mxu0
    %v178 = vadd.f32 0.0, %v177
    %v179 = vpop.f32.mrb[0].mxu0
    %180 = vmatprep.mubr.bf16.mxu0 0
    %181 = vmatmul.mubr.bf16.gmra.mrb[0].mxu0 %v96
    %v182 = vpop.f32.mrb[0].mxu0
    %v183 = vadd.f32 0.0, %v182
    %v184 = vpop.f32.mrb[0].mxu0
    %v185 = vpop.f32.mrb[0].mxu0
    %v186 = vadd.f32 0.0, %v185
    %v187 = vpop.f32.mrb[0].mxu0
    %188 = vmatprep.mubr.bf16.mxu0 0
    %189 = vmatmul.mubr.bf16.gmra.mrb[0].mxu0 %v99
    %v190 = vpop.f32.mrb[0].mxu0
    %v191 = vadd.f32 0.0, %v190
    %v192 = vpop.f32.mrb[0].mxu0
    %v193 = vpop.f32.mrb[0].mxu0
    %v194 = vadd.f32 0.0, %v193
    %v195 = vpop.f32.mrb[0].mxu0
    %196 = vmatprep.mubr.bf16.mxu0 0
    %197 = vmatmul.mubr.bf16.gmra.mrb[0].mxu0 %v102
    %v198 = vpop.f32.mrb[0].mxu0
    %v199 = vadd.f32 0.0, %v198
    %v200 = vpop.f32.mrb[0].mxu0
    %v201 = vpop.f32.mrb[0].mxu0
    %v202 = vadd.f32 0.0, %v201
    %v203 = vpop.f32.mrb[0].mxu0
    %204 = vdwg.mxu0
    %v205 = vpack.c.bf16 %v146, %v143
    %v206 = vpack.c.bf16 %v154, %v151
    %v207 = vpack.c.bf16 %v162, %v159
    %v208 = vpack.c.bf16 %v170, %v167
    %v209 = vpack.c.bf16 %v178, %v175
    %v210 = vpack.c.bf16 %v186, %v183
    %v211 = vpack.c.bf16 %v194, %v191
    %v212 = vpack.c.bf16 %v202, %v199
    %v221 = vunpack.c.l.b16 %v205
    %v222 = vunpack.c.h.b16 %v205
    %v223 = vunpack.c.l.b16 %v206
    %v224 = vunpack.c.h.b16 %v206
    %v225 = vunpack.c.l.b16 %v207
    %v226 = vunpack.c.h.b16 %v207
    %v227 = vunpack.c.l.b16 %v208
    %v228 = vunpack.c.h.b16 %v208
    %v229 = vunpack.c.l.b16 %v209
    %v230 = vunpack.c.h.b16 %v209
    %v231 = vunpack.c.l.b16 %v210
    %v232 = vunpack.c.h.b16 %v210
    %v233 = vunpack.c.l.b16 %v211
    %v234 = vunpack.c.h.b16 %v211
    %v235 = vunpack.c.l.b16 %v212
    %v236 = vunpack.c.h.b16 %v212
    %v237 = vpack.c.b16 %v221, %v221
    %v238 = vpack.c.b16 %v222, %v222
    %v239 = vpack.c.b16 %v223, %v223
    %v240 = vpack.c.b16 %v224, %v224
    %v241 = vpack.c.b16 %v225, %v225
    %v242 = vpack.c.b16 %v226, %v226
    %v243 = vpack.c.b16 %v227, %v227
    %v244 = vpack.c.b16 %v228, %v228
    %v245 = vpack.c.b16 %v229, %v229
    %v246 = vpack.c.b16 %v230, %v230
    %v247 = vpack.c.b16 %v231, %v231
    %v248 = vpack.c.b16 %v232, %v232
    %v249 = vpack.c.b16 %v233, %v233
    %v250 = vpack.c.b16 %v234, %v234
    %v251 = vpack.c.b16 %v235, %v235
    %v252 = vpack.c.b16 %v236, %v236
    %269 = vst [vmem:[#allocation2] sm:$0xf] %v237
    %270 = vst [vmem:[#allocation2 + $0x4] sm:$0xf] %v238
    %271 = vst [vmem:[#allocation2 + $0x8] sm:$0xf] %v239
    %272 = vst [vmem:[#allocation2 + $0xc] sm:$0xf] %v240
    %273 = vst [vmem:[#allocation2 + $0x10] sm:$0xf] %v241
    %274 = vst [vmem:[#allocation2 + $0x14] sm:$0xf] %v242
    %275 = vst [vmem:[#allocation2 + $0x18] sm:$0xf] %v243
    %276 = vst [vmem:[#allocation2 + $0x1c] sm:$0xf] %v244
    %277 = vst [vmem:[#allocation2 + $0x20] sm:$0xf] %v245
    %278 = vst [vmem:[#allocation2 + $0x24] sm:$0xf] %v246
    %279 = vst [vmem:[#allocation2 + $0x28] sm:$0xf] %v247
    %280 = vst [vmem:[#allocation2 + $0x2c] sm:$0xf] %v248
    %281 = vst [vmem:[#allocation2 + $0x30] sm:$0xf] %v249
    %282 = vst [vmem:[#allocation2 + $0x34] sm:$0xf] %v250
    %283 = vst [vmem:[#allocation2 + $0x38] sm:$0xf] %v251
    %284 = vst [vmem:[#allocation2 + $0x3c] sm:$0xf] %v252
    %v285 = vadd.f32 %v143, %v146
    %v286 = vadd.f32 %v285, %v151
    %v287 = vadd.f32 %v286, %v154
    %v288 = vadd.f32 %v287, %v159
    %v289 = vadd.f32 %v288, %v162
    %v290 = vadd.f32 %v289, %v167
    %v291 = vadd.f32 %v290, %v170
    %v292 = vadd.f32 %v291, %v175
    %v293 = vadd.f32 %v292, %v178
    %v294 = vadd.f32 %v293, %v183
    %v295 = vadd.f32 %v294, %v186
    %v296 = vadd.f32 %v295, %v191
    %v297 = vadd.f32 %v296, %v194
    %v298 = vadd.f32 %v297, %v199
    %v299 = vadd.f32 %v298, %v202
    %v300 = vrot.slane %v299, 4
    %v301 = vadd.f32 %v299, %v300
    %v302 = vrot.slane %v301, 2
    %v303 = vadd.f32 %v301, %v302
    %v304 = vrot.slane %v303, 1
    %v305 = vadd.f32 %v303, %v304
    %v306 = vmul.f32 %v143, %v143
    %v307 = vmul.f32 %v146, %v146
    %v308 = vmul.f32 %v151, %v151
    %v309 = vmul.f32 %v154, %v154
    %v310 = vmul.f32 %v159, %v159
    %v311 = vmul.f32 %v162, %v162
    %v312 = vmul.f32 %v167, %v167
    %v313 = vmul.f32 %v170, %v170
    %v314 = vmul.f32 %v175, %v175
    %v315 = vmul.f32 %v178, %v178
    %v316 = vmul.f32 %v183, %v183
    %v317 = vmul.f32 %v186, %v186
    %v318 = vmul.f32 %v191, %v191
    %v319 = vmul.f32 %v194, %v194
    %v320 = vmul.f32 %v199, %v199
    %v321 = vmul.f32 %v202, %v202
    %v322 = vadd.f32 %v306, %v307
    %v323 = vadd.f32 %v322, %v308
    %v324 = vadd.f32 %v323, %v309
    %v325 = vadd.f32 %v324, %v310
    %v326 = vadd.f32 %v325, %v311
    %v327 = vadd.f32 %v326, %v312
    %v328 = vadd.f32 %v327, %v313
    %v329 = vadd.f32 %v328, %v314
    %v330 = vadd.f32 %v329, %v315
    %v331 = vadd.f32 %v330, %v316
    %v332 = vadd.f32 %v331, %v317
    %v333 = vadd.f32 %v332, %v318
    %v334 = vadd.f32 %v333, %v319
    %v335 = vadd.f32 %v334, %v320
    %v336 = vadd.f32 %v335, %v321
    %v337 = vrot.slane %v336, 4
    %v338 = vadd.f32 %v336, %v337
    %v339 = vrot.slane %v338, 2
    %v340 = vadd.f32 %v338, %v339
    %v341 = vrot.slane %v340, 1
    %v342 = vadd.f32 %v340, %v341
    %vm343 = vcmask 1040384
    %v344 = vsel %vm343, %v305, %v342
    %vm345 = vcmask 1041408
    %v346 = vsel %vm345, %v344, 0.0
    %347 = vst [vmem:[#allocation4] sm:$0xff] %v346
    // Predicated region
    $region18: #{tpu_custom_call.1} parent=1 // pred_check
      _
    $region19: #{tpu_custom_call.1} parent=1 // pred_check_branch
      %349 = sbr.rel (0) target = $region21
    $region20: #{tpu_custom_call.1} parent=1 // pred_region
      %s351 = ssub.s32 1024, 1024
      %352 = vsyncadd [#allocation3], %s351
      %s353 = sshll.u32 [#allocation2], 4
      %s354 = int_to_ptr.vmem [resolvable:$true] %s353
      %359 = dma.vmem_to_hbm [thread:$0]  %s354, 1024, %s4, [#allocation3], 64, 64, 4
    $region21: #{tpu_custom_call.1} parent=1 // pred_fallthru
      _
    // Predicated region
    $region22: #{tpu_custom_call.1} parent=1 // pred_check
      _
    $region23: #{tpu_custom_call.1} parent=1 // pred_check_branch
      %361 = sbr.rel (0) target = $region25
    $region24: #{tpu_custom_call.1} parent=1 // pred_region
      %s363 = ssub.s32 128, 128
      %364 = vsyncadd [#allocation5], %s363
      %s366 = sshll.u32 [#allocation4], 4
      %s367 = int_to_ptr.vmem [resolvable:$true] %s366
      %369 = dma.vmem_to_hbm [thread:$0]  %s367, 128, %s5, [#allocation5]
    $region25: #{tpu_custom_call.1} parent=1 // pred_fallthru
      _
    // Predicated region
    $region26: #{tpu_custom_call.1} parent=1 // pred_check
      _
    $region27: #{tpu_custom_call.1} parent=1 // pred_check_branch
      %371 = sbr.rel (0) target = $region29
    $region28: #{tpu_custom_call.1} parent=1 // pred_region
      %372 = dma.done [#allocation3], 1024
    $region29: #{tpu_custom_call.1} parent=1 // pred_fallthru
      _
    // Predicated region
    $region30: #{tpu_custom_call.1} parent=1 // pred_check
      _
    $region31: #{tpu_custom_call.1} parent=1 // pred_check_branch
      %374 = sbr.rel (0) target = $region33
    $region32: #{tpu_custom_call.1} parent=1 // pred_region
      %375 = dma.done [#allocation5], 128
    $region33: #{tpu_custom_call.1} parent=1 // pred_fallthru
      _
    %376 = vsyncpa [#allocation3], 1
    %377 = vsyncpa [#allocation5], 1

</llo_original>
